<compile_context>
chip_gen: v7x
topology: tpu7x:2x2x1
jax: 0.10.0
libtpu: 0.0.40
codegen_flags: <defaults>
</compile_context>

<pallas_src>
import jax
import jax.numpy as jnp
import numpy as np
from jax.experimental import pallas as pl
from jax.experimental.pallas import tpu as pltpu

B = 8        # batch (matches the 8-sublane vreg height)
D = 16       # data dim (true)
H = 32       # hidden dim (true)
DP = 128     # lane-padded data dim
HP = 128     # lane-padded hidden dim
NSTEPS = 8   # fixed Euler steps for the fused-integration kernel

_INV_N = 1.0 / float(B * D)   # mean divisor uses the *unpadded* size


# ----------------------------------------------------------------------------
# One-time parameter preparation (hoisted out of the per-evaluation path).
# ----------------------------------------------------------------------------
def prepare_params(w1x, w1t, b1, w2, b2):
    f32 = jnp.float32
    # Pre-transpose so both matmuls are plain jnp.dot(a, b); zero-pad to 128 lanes.
    w1x_t = jnp.zeros((DP, HP), f32).at[:D, :H].set(w1x.T)   # (D, H) layout
    w2_t = jnp.zeros((HP, DP), f32).at[:H, :D].set(w2.T)     # (H, D) layout
    w1t_p = jnp.zeros((1, HP), f32).at[0, :H].set(w1t)
    b1_p = jnp.zeros((1, HP), f32).at[0, :H].set(b1)
    b2_p = jnp.zeros((1, DP), f32).at[0, :D].set(b2)
    # Analytic-trace vector c_k = sum_i W2[i,k] * W1x[k,i]; zero in the padding,
    # so the padded hidden columns contribute nothing to the divergence.
    c_p = jnp.sum(w2_t * w1x_t.T, axis=1).reshape(1, HP)
    return (w1x_t, w1t_p, b1_p, w2_t, b2_p, c_p)


# ----------------------------------------------------------------------------
# Single RHS evaluation kernel (the module's forward).
# ----------------------------------------------------------------------------
def _cnf_rhs_kernel(t_ref,       # SMEM (1,)      scalar time
                    x_ref,       # VMEM (B, DP)   zero-padded x
                    w1x_ref,     # VMEM (DP, HP)
                    w1t_ref,     # VMEM (1, HP)
                    b1_ref,      # VMEM (1, HP)
                    w2_ref,      # VMEM (HP, DP)
                    b2_ref,      # VMEM (1, DP)
                    c_ref,       # VMEM (1, HP)
                    dx_ref,      # VMEM (B, DP)   out (lane-dense)
                    dlogp_ref,   # VMEM (B, DP)   out (value broadcast over lanes)
                    reg_ref):    # SMEM (2,)      out [reg_l1, reg_l2]
    t = t_ref[0]
    x = x_ref[...]

    pre = jnp.dot(x, w1x_ref[...], preferred_element_type=jnp.float32)
    h = jnp.tanh(pre + t * w1t_ref[...] + b1_ref[...])            # (B, HP)

    dx = jnp.dot(h, w2_ref[...], preferred_element_type=jnp.float32) + b2_ref[...]
    dx_ref[...] = dx                                              # full vst, no mask

    div = jnp.sum((1.0 - h * h) * c_ref[...], axis=1, keepdims=True)   # (B, 1)
    dlogp_ref[...] = jnp.broadcast_to(-div, dlogp_ref.shape)      # lane-dense store

    # FFJORD l1/l2 regularization fns (padded columns of dx are exactly 0, so
    # sums equal the unpadded sums; divisor stays the unpadded B*D).
    reg_ref[0] = jnp.sum(jnp.abs(dx)) * _INV_N
    reg_ref[1] = jnp.sum(dx * dx) * _INV_N


def regularized_cnf_odefunc(t, state, prepared_params):
    """Pallas equivalent of RegularizedCNFODEfunc.forward(t, state)."""
    x, logp = state[0], state[1]
    w1x_t, w1t_p, b1_p, w2_t, b2_p, c_p = prepared_params

    x_p = jnp.pad(x.astype(jnp.float32), ((0, 0), (0, DP - D)))
    t_arr = jnp.asarray(t, jnp.float32).reshape(1)

    smem = pl.BlockSpec(memory_space=pltpu.SMEM)
    vmem = pl.BlockSpec(memory_space=pltpu.MemorySpace.VMEM)

    dx_p, dlogp_p, reg = pl.pallas_call(
        _cnf_rhs_kernel,
        out_shape=(
            jax.ShapeDtypeStruct((B, DP), jnp.float32),   # dx (padded)
            jax.ShapeDtypeStruct((B, DP), jnp.float32),   # dlogp (broadcast)
            jax.ShapeDtypeStruct((2,), jnp.float32),      # [reg_l1, reg_l2]
        ),
        in_specs=[smem] + [vmem] * 7,
        out_specs=(vmem, vmem, smem),
    )(t_arr, x_p, w1x_t, w1t_p, b1_p, w2_t, b2_p, c_p)

    dx = dx_p[:, :D]
    dlogp = dlogp_p[:, :1]
    if len(state) > 2:
        return (dx, dlogp, reg[0], reg[1])
    return (dx, dlogp)


# ----------------------------------------------------------------------------
# Fused ODE loop: NSTEPS forward Euler steps in ONE pallas_call.
# Weights are DMA'd to VMEM once and stay resident across all RHS evaluations;
# the reg states are integrated (d reg / dt = reg_fn) exactly as FFJORD does.
# ----------------------------------------------------------------------------
def _cnf_fused_euler_kernel(tcfg_ref,     # SMEM (2,)  [t0, dt]
                            x0_ref,       # VMEM (B, DP)
                            logp0_ref,    # VMEM (B, DP)  (broadcast over lanes)
                            w1x_ref, w1t_ref, b1_ref, w2_ref, b2_ref, c_ref,
                            x_out_ref,    # VMEM (B, DP)  out (also state carrier)
                            logp_out_ref, # VMEM (B, DP)  out (also state carrier)
                            reg_out_ref): # SMEM (2,)     out, accumulated
    t0 = tcfg_ref[0]
    dt = tcfg_ref[1]

    x_out_ref[...] = x0_ref[...]
    logp_out_ref[...] = logp0_ref[...]
    reg_out_ref[0] = jnp.float32(0.0)
    reg_out_ref[1] = jnp.float32(0.0)

    @pl.loop(0, NSTEPS)
    def _(s):
        t = t0 + dt * s.astype(jnp.float32)
        x = x_out_ref[...]
        h = jnp.tanh(jnp.dot(x, w1x_ref[...], preferred_element_type=jnp.float32)
                     + t * w1t_ref[...] + b1_ref[...])
        dx = jnp.dot(h, w2_ref[...], preferred_element_type=jnp.float32) + b2_ref[...]
        div = jnp.sum((1.0 - h * h) * c_ref[...], axis=1, keepdims=True)

        x_out_ref[...] = x + dt * dx
        logp_out_ref[...] = logp_out_ref[...] + dt * jnp.broadcast_to(
            -div, logp_out_ref.shape)
        reg_out_ref[0] = reg_out_ref[0] + dt * jnp.sum(jnp.abs(dx)) * _INV_N
        reg_out_ref[1] = reg_out_ref[1] + dt * jnp.sum(dx * dx) * _INV_N


def regularized_cnf_euler_integrate(t0, dt, state, prepared_params):
    """Fixed-step Euler integration of the regularized CNF ODE, fused in one kernel."""
    x, logp = state[0], state[1]
    w1x_t, w1t_p, b1_p, w2_t, b2_p, c_p = prepared_params

    x_p = jnp.pad(x.astype(jnp.float32), ((0, 0), (0, DP - D)))
    logp_p = jnp.broadcast_to(logp.astype(jnp.float32), (B, DP))
    tcfg = jnp.stack([jnp.asarray(t0, jnp.float32), jnp.asarray(dt, jnp.float32)])

    smem = pl.BlockSpec(memory_space=pltpu.SMEM)
    vmem = pl.BlockSpec(memory_space=pltpu.MemorySpace.VMEM)

    x_out, logp_out, reg = pl.pallas_call(
        _cnf_fused_euler_kernel,
        out_shape=(
            jax.ShapeDtypeStruct((B, DP), jnp.float32),
            jax.ShapeDtypeStruct((B, DP), jnp.float32),
            jax.ShapeDtypeStruct((2,), jnp.float32),
        ),
        in_specs=[smem] + [vmem] * 8,
        out_specs=(vmem, vmem, smem),
    )(tcfg, x_p, logp_p, w1x_t, w1t_p, b1_p, w2_t, b2_p, c_p)

    return x_out[:, :D], logp_out[:, :1], reg[0], reg[1]


# ----------------------------------------------------------------------------
# Pure-JAX references.
# ----------------------------------------------------------------------------
def _reference_rhs(t, x, raw_params):
    w1x, w1t, b1, w2, b2 = raw_params
    h = jnp.tanh(x @ w1x.T + t * w1t[None, :] + b1[None, :])
    dx = h @ w2.T + b2[None, :]
    c = jnp.sum(w2.T * w1x, axis=1)
    dlogp = -jnp.sum((1.0 - h * h) * c[None, :], axis=1, keepdims=True)
    reg_l1 = jnp.mean(jnp.abs(dx))
    reg_l2 = jnp.mean(dx ** 2)
    return dx, dlogp, reg_l1, reg_l2


def _reference_euler(t0, dt, nsteps, x, raw_params):
    logp = jnp.zeros((B, 1), jnp.float32)
    r1 = jnp.float32(0.0)
    r2 = jnp.float32(0.0)
    for s in range(nsteps):
        t = t0 + dt * s
        dx, dlogp, l1, l2 = _reference_rhs(t, x, raw_params)
        x = x + dt * dx
        logp = logp + dt * dlogp
        r1 = r1 + dt * l1
        r2 = r2 + dt * l2
    return x, logp, r1, r2


if __name__ == "__main__":
    key = jax.random.PRNGKey(0)
    k_x, k_w1x, k_w1t, k_b1, k_w2, k_b2 = jax.random.split(key, 6)

    # deterministic synthetic parameters (shapes of the MLP odefunc)
    w1x = 0.3 * jax.random.normal(k_w1x, (H, D), jnp.float32)
    w1t = 0.3 * jax.random.normal(k_w1t, (H,), jnp.float32)
    b1 = 0.1 * jax.random.normal(k_b1, (H,), jnp.float32)
    w2 = 0.3 * jax.random.normal(k_w2, (D, H), jnp.float32)
    b2 = 0.1 * jax.random.normal(k_b2, (D,), jnp.float32)
    raw_params = (w1x, w1t, b1, w2, b2)
    prepared = prepare_params(*raw_params)   # one-time prep (hoisted out of the ODE loop)

    x = jax.random.normal(k_x, (B, D), jnp.float32)
    logp = jnp.zeros((B, 1), jnp.float32)
    reg0 = jnp.zeros((), jnp.float32)
    state = (x, logp, reg0, reg0)            # len > 2 => regularization path
    t = jnp.float32(0.5)

    # --- single RHS evaluation (the module's forward) ---
    dx, dlogp, reg_l1, reg_l2 = jax.block_until_ready(
        regularized_cnf_odefunc(t, state, prepared))
    r_dx, r_dlogp, r_l1, r_l2 = _reference_rhs(t, x, raw_params)
    np.testing.assert_allclose(np.asarray(dx), np.asarray(r_dx), rtol=1e-5, atol=1e-5)
    np.testing.assert_allclose(np.asarray(dlogp), np.asarray(r_dlogp), rtol=1e-5, atol=1e-5)
    np.testing.assert_allclose(np.asarray(reg_l1), np.asarray(r_l1), rtol=1e-5, atol=1e-5)
    np.testing.assert_allclose(np.asarray(reg_l2), np.asarray(r_l2), rtol=1e-5, atol=1e-5)

    # no-regularization path (len(state) == 2)
    dx2, dlogp2 = jax.block_until_ready(regularized_cnf_odefunc(t, (x, logp), prepared))
    np.testing.assert_allclose(np.asarray(dx2), np.asarray(r_dx), rtol=1e-5, atol=1e-5)
    np.testing.assert_allclose(np.asarray(dlogp2), np.asarray(r_dlogp), rtol=1e-5, atol=1e-5)

    # --- fused NSTEPS-step Euler integration in one kernel launch ---
    t0, dt_step = jnp.float32(0.0), jnp.float32(0.1)
    xT, logpT, rl1, rl2 = jax.block_until_ready(
        regularized_cnf_euler_integrate(t0, dt_step, state, prepared))
    r_xT, r_logpT, r_rl1, r_rl2 = _reference_euler(t0, dt_step, NSTEPS, x, raw_params)
    np.testing.assert_allclose(np.asarray(xT), np.asarray(r_xT), rtol=1e-4, atol=1e-4)
    np.testing.assert_allclose(np.asarray(logpT), np.asarray(r_logpT), rtol=1e-4, atol=1e-4)
    np.testing.assert_allclose(np.asarray(rl1), np.asarray(r_rl1), rtol=1e-4, atol=1e-4)
    np.testing.assert_allclose(np.asarray(rl2), np.asarray(r_rl2), rtol=1e-4, atol=1e-4)

    print("KERNEL_OK")
</pallas_src>

<mosaic_0001>
module attributes {stable_mosaic.version = 11 : i64} {
  func.func @_cnf_rhs_kernel(%arg0: memref<1xf32, #tpu.memory_space<smem>>, %arg1: memref<8x128xf32, #tpu.memory_space<vmem>>, %arg2: memref<128x128xf32, #tpu.memory_space<vmem>>, %arg3: memref<1x128xf32, #tpu.memory_space<vmem>>, %arg4: memref<1x128xf32, #tpu.memory_space<vmem>>, %arg5: memref<128x128xf32, #tpu.memory_space<vmem>>, %arg6: memref<1x128xf32, #tpu.memory_space<vmem>>, %arg7: memref<1x128xf32, #tpu.memory_space<vmem>>, %arg8: memref<8x128xf32, #tpu.memory_space<vmem>>, %arg9: memref<8x128xf32, #tpu.memory_space<vmem>>, %arg10: memref<2xf32, #tpu.memory_space<smem>>) attributes {dimension_semantics = [], scalar_prefetch = 0 : i64, scratch_operands = 0 : i64, tpu.core_type = #tpu.core_type<tc>} {
    %c0 = arith.constant 0 : index
    %0 = memref.load %arg0[%c0] : memref<1xf32, #tpu.memory_space<smem>>
    %c0_0 = arith.constant 0 : index
    %c0_1 = arith.constant 0 : index
    %1 = vector.load %arg1[%c0_0, %c0_1] : memref<8x128xf32, #tpu.memory_space<vmem>>, vector<8x128xf32>
    %c0_2 = arith.constant 0 : index
    %c0_3 = arith.constant 0 : index
    %2 = vector.load %arg2[%c0_2, %c0_3] : memref<128x128xf32, #tpu.memory_space<vmem>>, vector<128x128xf32>
    %cst = arith.constant dense<0.000000e+00> : vector<8x128xf32>
    %3 = tpu.matmul %1, %2, %cst {dimension_numbers = #tpu.dot_dimension_numbers<[1], [0], [0], [1], [0, 0, 1, 1], [], []>} : vector<8x128xf32>, vector<128x128xf32>, vector<8x128xf32> -> vector<8x128xf32>
    %c0_4 = arith.constant 0 : index
    %c0_5 = arith.constant 0 : index
    %4 = vector.load %arg3[%c0_4, %c0_5] : memref<1x128xf32, #tpu.memory_space<vmem>>, vector<1x128xf32>
    %5 = vector.broadcast %0 : f32 to vector<1x128xf32>
    %6 = arith.mulf %5, %4 : vector<1x128xf32>
    %7 = vector.broadcast %6 : vector<1x128xf32> to vector<8x128xf32>
    %8 = arith.addf %3, %7 : vector<8x128xf32>
    %c0_6 = arith.constant 0 : index
    %c0_7 = arith.constant 0 : index
    %9 = vector.load %arg4[%c0_6, %c0_7] : memref<1x128xf32, #tpu.memory_space<vmem>>, vector<1x128xf32>
    %10 = vector.broadcast %9 : vector<1x128xf32> to vector<8x128xf32>
    %11 = arith.addf %8, %10 : vector<8x128xf32>
    %12 = math.tanh %11 : vector<8x128xf32>
    %c0_8 = arith.constant 0 : index
    %c0_9 = arith.constant 0 : index
    %13 = vector.load %arg5[%c0_8, %c0_9] : memref<128x128xf32, #tpu.memory_space<vmem>>, vector<128x128xf32>
    %cst_10 = arith.constant dense<0.000000e+00> : vector<8x128xf32>
    %14 = tpu.matmul %12, %13, %cst_10 {dimension_numbers = #tpu.dot_dimension_numbers<[1], [0], [0], [1], [0, 0, 1, 1], [], []>} : vector<8x128xf32>, vector<128x128xf32>, vector<8x128xf32> -> vector<8x128xf32>
    %c0_11 = arith.constant 0 : index
    %c0_12 = arith.constant 0 : index
    %15 = vector.load %arg6[%c0_11, %c0_12] : memref<1x128xf32, #tpu.memory_space<vmem>>, vector<1x128xf32>
    %16 = vector.broadcast %15 : vector<1x128xf32> to vector<8x128xf32>
    %17 = arith.addf %14, %16 : vector<8x128xf32>
    %c0_13 = arith.constant 0 : index
    %c0_14 = arith.constant 0 : index
    %18 = vector.load %arg8[%c0_13, %c0_14] : memref<8x128xf32, #tpu.memory_space<vmem>>, vector<8x128xf32>
    tpu.vector_store %arg8[%c0_13, %c0_14], %17 {strides = array<i32>} : memref<8x128xf32, #tpu.memory_space<vmem>>, vector<8x128xf32>,
    %19 = arith.mulf %12, %12 : vector<8x128xf32>
    %cst_15 = arith.constant 1.000000e+00 : f32
    %20 = vector.broadcast %cst_15 : f32 to vector<8x128xf32>
    %21 = arith.subf %20, %19 : vector<8x128xf32>
    %c0_16 = arith.constant 0 : index
    %c0_17 = arith.constant 0 : index
    %22 = vector.load %arg7[%c0_16, %c0_17] : memref<1x128xf32, #tpu.memory_space<vmem>>, vector<1x128xf32>
    %23 = vector.broadcast %22 : vector<1x128xf32> to vector<8x128xf32>
    %24 = arith.mulf %21, %23 : vector<8x128xf32>
    %cst_18 = arith.constant dense<0.000000e+00> : vector<8xf32>
    %25 = vector.multi_reduction <add>, %24, %cst_18 [1] : vector<8x128xf32> to vector<8xf32>
    %26 = vector.shape_cast %25 : vector<8xf32> to vector<8x1xf32>
    %cst_19 = arith.constant 0.000000e+00 : f32
    %27 = vector.broadcast %cst_19 : f32 to vector<8x1xf32>
    %28 = arith.subf %27, %26 : vector<8x1xf32>
    %29 = vector.shape_cast %28 : vector<8x1xf32> to vector<8x1xf32>
    %30 = vector.broadcast %29 : vector<8x1xf32> to vector<8x128xf32>
    %c0_20 = arith.constant 0 : index
    %c0_21 = arith.constant 0 : index
    %31 = vector.load %arg9[%c0_20, %c0_21] : memref<8x128xf32, #tpu.memory_space<vmem>>, vector<8x128xf32>
    tpu.vector_store %arg9[%c0_20, %c0_21], %30 {strides = array<i32>} : memref<8x128xf32, #tpu.memory_space<vmem>>, vector<8x128xf32>,
    %32 = math.absf %17 : vector<8x128xf32>
    %33 = vector.shape_cast %32 : vector<8x128xf32> to vector<1x8x128xf32>
    %cst_22 = arith.constant dense<0.000000e+00> : vector<1xf32>
    %34 = vector.multi_reduction <add>, %33, %cst_22 [1, 2] : vector<1x8x128xf32> to vector<1xf32>
    %35 = vector.shape_cast %34 : vector<1xf32> to vector<1x1x1xf32>
    %36 = vector.extract %35[0, 0, 0] : f32 from vector<1x1x1xf32>
    %cst_23 = arith.constant 7.812500e-03 : f32
    %37 = arith.mulf %36, %cst_23 : f32
    %c0_24 = arith.constant 0 : index
    %38 = memref.load %arg10[%c0_24] : memref<2xf32, #tpu.memory_space<smem>>
    memref.store %37, %arg10[%c0_24] : memref<2xf32, #tpu.memory_space<smem>>
    %39 = arith.mulf %17, %17 : vector<8x128xf32>
    %40 = vector.shape_cast %39 : vector<8x128xf32> to vector<1x8x128xf32>
    %cst_25 = arith.constant dense<0.000000e+00> : vector<1xf32>
    %41 = vector.multi_reduction <add>, %40, %cst_25 [1, 2] : vector<1x8x128xf32> to vector<1xf32>
    %42 = vector.shape_cast %41 : vector<1xf32> to vector<1x1x1xf32>
    %43 = vector.extract %42[0, 0, 0] : f32 from vector<1x1x1xf32>
    %cst_26 = arith.constant 7.812500e-03 : f32
    %44 = arith.mulf %43, %cst_26 : f32
    %c1 = arith.constant 1 : index
    %45 = memref.load %arg10[%c1] : memref<2xf32, #tpu.memory_space<smem>>
    memref.store %44, %arg10[%c1] : memref<2xf32, #tpu.memory_space<smem>>
    return
  }
}

</mosaic_0001>

<llo_original>
// kernel: tpu_custom_call.1
$region0: #{tpu_custom_call.1}
  #allocation0 [shape = 'u32[]', space=smem, size = 0x4, offset = 0x4, fixed_abs, tag = 'smem constant byte address 0x4 - core index']
  #allocation1 [shape = 'u32[144,128]{1,0:T(1,128)}', space=vmem, size = 0x12000, scoped, tag = 'internal scratch']
  #allocation2 [shape = 'f32[1]{0:T(128)S(6)}', space=smem, size = 0x200, scoped, tag = 'scoped memory for tpu_custom_call.1']
  %s0 = inlined_call_operand.<no memory space> [shape: f32[1], index: 0, kind: input, shape index: {}]
  %s1 = inlined_call_operand.hbm [shape: f32[8,128], index: 1, kind: input, shape index: {}]
  %s2 = inlined_call_operand.hbm [shape: f32[128,128], index: 2, kind: input, shape index: {}]
  %s3 = inlined_call_operand.vmem [shape: f32[1,128], index: 3, kind: input, shape index: {}]
  %s4 = inlined_call_operand.vmem [shape: f32[1,128], index: 4, kind: input, shape index: {}]
  %s5 = inlined_call_operand.hbm [shape: f32[128,128], index: 5, kind: input, shape index: {}]
  %s6 = inlined_call_operand.vmem [shape: f32[1,128], index: 6, kind: input, shape index: {}]
  %s7 = inlined_call_operand.vmem [shape: f32[1,128], index: 7, kind: input, shape index: {}]
  %s8 = inlined_call_operand.hbm [shape: f32[8,128], index: 8, kind: output, shape index: {0}]
  %s9 = inlined_call_operand.hbm [shape: f32[8,128], index: 9, kind: output, shape index: {1}]
  %s10 = inlined_call_operand.hbm [shape: f32[2], index: 10, kind: output, shape index: {2}]
  %11 = xla_tuple %s8, %s9, %s10
  %s12 = sld [smem:[#allocation0]]
  $region70: #{tpu_custom_call.1} parent=0
    _
  %s14 = ssub.s32 1, %s12
  %s15 = scalar_select 0, %s14, %s12
  %16 = sst [smem:[#allocation2]] %s0
  $region1: #{tpu_custom_call.1} parent=0
    #allocation3 [shape = 'u8[4096]{0}', space=vmem, size = 0x1000, scoped, tag = 'input window, operand 1, single buffered']
    #allocation4 [shape = 's32[1]{0}', space=sflag, size = 0x4, scoped, tag = 'scoped memory for tpu_custom_call.1']
    #allocation5 [shape = 's32[1]{0}', space=sflag, size = 0x4, scoped, tag = 'scoped memory for tpu_custom_call.1']
    #allocation6 [shape = 's32[1]{0}', space=sflag, size = 0x4, scoped, tag = 'scoped memory for tpu_custom_call.1']
    #allocation7 [shape = 'u8[65536]{0}', space=vmem, size = 0x10000, scoped, tag = 'input window, operand 2, single buffered']
    #allocation8 [shape = 's32[1]{0}', space=sflag, size = 0x4, scoped, tag = 'scoped memory for tpu_custom_call.1']
    #allocation9 [shape = 'u8[65536]{0}', space=vmem, size = 0x10000, scoped, tag = 'input window, operand 5, single buffered']
    #allocation10 [shape = 'u8[4096]{0}', space=vmem, size = 0x1000, scoped, tag = 'output window, operand 0, single buffered']
    #allocation11 [shape = 'u8[4096]{0}', space=vmem, size = 0x1000, scoped, tag = 'output window, operand 1, single buffered']
    #allocation12 [shape = 's32[1]{0}', space=sflag, size = 0x4, scoped, tag = 'scoped memory for tpu_custom_call.1']
    #allocation13 [shape = 'u8[512]{0}', space=smem, size = 0x200, scoped, tag = 'output window, operand 2, single buffered']
    %17 = vsyncpa [#allocation4], 0
    %18 = vsyncpa [#allocation8], 0
    %19 = vsyncpa [#allocation5], 0
    %20 = vsyncpa [#allocation12], 0
    %21 = vsyncpa [#allocation6], 0
    // Predicated region
    $region2: #{tpu_custom_call.1} parent=1 // pred_check
      _
    $region3: #{tpu_custom_call.1} parent=1 // pred_check_branch
      %23 = sbr.rel (0) target = $region5
    $region4: #{tpu_custom_call.1} parent=1 // pred_region
      _
    $region5: #{tpu_custom_call.1} parent=1 // pred_fallthru
      _
    // Predicated region
    $region6: #{tpu_custom_call.1} parent=1 // pred_check
      _
    $region7: #{tpu_custom_call.1} parent=1 // pred_check_branch
      %25 = sbr.rel (0) target = $region9
    $region8: #{tpu_custom_call.1} parent=1 // pred_region
      %s27 = ssub.s32 128, 128
      %28 = vsyncadd [#allocation4], %s27
      %s30 = sshll.u32 [#allocation3], 4
      %s31 = int_to_ptr.vmem [resolvable:$true] %s30
      %33 = dma.hbm_to_vmem [thread:$0]  %s1, 128, %s31, [#allocation4]
    $region9: #{tpu_custom_call.1} parent=1 // pred_fallthru
      _
    // Predicated region
    $region10: #{tpu_custom_call.1} parent=1 // pred_check
      _
    $region11: #{tpu_custom_call.1} parent=1 // pred_check_branch
      %35 = sbr.rel (0) target = $region13
    $region12: #{tpu_custom_call.1} parent=1 // pred_region
      %s37 = ssub.s32 2048, 2048
      %38 = vsyncadd [#allocation8], %s37
      %s39 = sshll.u32 [#allocation7], 4
      %s40 = int_to_ptr.vmem [resolvable:$true] %s39
      %45 = dma.hbm_to_vmem [thread:$0]  %s2, 2048, %s40, [#allocation8], 128, 128, 8
    $region13: #{tpu_custom_call.1} parent=1 // pred_fallthru
      _
    // Predicated region
    $region14: #{tpu_custom_call.1} parent=1 // pred_check
      _
    $region15: #{tpu_custom_call.1} parent=1 // pred_check_branch
      %47 = sbr.rel (0) target = $region17
    $region16: #{tpu_custom_call.1} parent=1 // pred_region
      _
    $region17: #{tpu_custom_call.1} parent=1 // pred_fallthru
      _
    // Predicated region
    $region18: #{tpu_custom_call.1} parent=1 // pred_check
      _
    $region19: #{tpu_custom_call.1} parent=1 // pred_check_branch
      %49 = sbr.rel (0) target = $region21
    $region20: #{tpu_custom_call.1} parent=1 // pred_region
      _
    $region21: #{tpu_custom_call.1} parent=1 // pred_fallthru
      _
    // Predicated region
    $region22: #{tpu_custom_call.1} parent=1 // pred_check
      _
    $region23: #{tpu_custom_call.1} parent=1 // pred_check_branch
      %51 = sbr.rel (0) target = $region25
    $region24: #{tpu_custom_call.1} parent=1 // pred_region
      %s53 = ssub.s32 2048, 2048
      %54 = vsyncadd [#allocation8], %s53
      %s55 = sshll.u32 [#allocation9], 4
      %s56 = int_to_ptr.vmem [resolvable:$true] %s55
      %61 = dma.hbm_to_vmem [thread:$0]  %s5, 2048, %s56, [#allocation8], 128, 128, 8
    $region25: #{tpu_custom_call.1} parent=1 // pred_fallthru
      _
    // Predicated region
    $region26: #{tpu_custom_call.1} parent=1 // pred_check
      _
    $region27: #{tpu_custom_call.1} parent=1 // pred_check_branch
      %63 = sbr.rel (0) target = $region29
    $region28: #{tpu_custom_call.1} parent=1 // pred_region
      _
    $region29: #{tpu_custom_call.1} parent=1 // pred_fallthru
      _
    // Predicated region
    $region30: #{tpu_custom_call.1} parent=1 // pred_check
      _
    $region31: #{tpu_custom_call.1} parent=1 // pred_check_branch
      %65 = sbr.rel (0) target = $region33
    $region32: #{tpu_custom_call.1} parent=1 // pred_region
      _
    $region33: #{tpu_custom_call.1} parent=1 // pred_fallthru
      _
    // Predicated region
    $region34: #{tpu_custom_call.1} parent=1 // pred_check
      _
    $region35: #{tpu_custom_call.1} parent=1 // pred_check_branch
      %67 = sbr.rel (0) target = $region37
    $region36: #{tpu_custom_call.1} parent=1 // pred_region
      %68 = dma.done [#allocation4], 128
    $region37: #{tpu_custom_call.1} parent=1 // pred_fallthru
      _
    // Predicated region
    $region38: #{tpu_custom_call.1} parent=1 // pred_check
      _
    $region39: #{tpu_custom_call.1} parent=1 // pred_check_branch
      %70 = sbr.rel (0) target = $region41
    $region40: #{tpu_custom_call.1} parent=1 // pred_region
      %71 = dma.done [#allocation8], 2048
    $region41: #{tpu_custom_call.1} parent=1 // pred_fallthru
      _
    // Predicated region
    $region42: #{tpu_custom_call.1} parent=1 // pred_check
      _
    $region43: #{tpu_custom_call.1} parent=1 // pred_check_branch
      %73 = sbr.rel (0) target = $region45
    $region44: #{tpu_custom_call.1} parent=1 // pred_region
      %74 = dma.done [#allocation8], 2048
    $region45: #{tpu_custom_call.1} parent=1 // pred_fallthru
      _
    %s75 = sld [smem:[#allocation2]]
    %v76 = vld [vmem:[#allocation3] sm:$0xff]
    %v77 = vld [vmem:[#allocation7] sm:$0xff]
    %v78 = vld [vmem:[#allocation7 + $0x8] sm:$0xff]
    %v79 = vld [vmem:[#allocation7 + $0x10] sm:$0xff]
    %v80 = vld [vmem:[#allocation7 + $0x18] sm:$0xff]
    %v81 = vld [vmem:[#allocation7 + $0x20] sm:$0xff]
    %v82 = vld [vmem:[#allocation7 + $0x28] sm:$0xff]
    %v83 = vld [vmem:[#allocation7 + $0x30] sm:$0xff]
    %v84 = vld [vmem:[#allocation7 + $0x38] sm:$0xff]
    %v85 = vld [vmem:[#allocation7 + $0x40] sm:$0xff]
    %v86 = vld [vmem:[#allocation7 + $0x48] sm:$0xff]
    %v87 = vld [vmem:[#allocation7 + $0x50] sm:$0xff]
    %v88 = vld [vmem:[#allocation7 + $0x58] sm:$0xff]
    %v89 = vld [vmem:[#allocation7 + $0x60] sm:$0xff]
    %v90 = vld [vmem:[#allocation7 + $0x68] sm:$0xff]
    %v91 = vld [vmem:[#allocation7 + $0x70] sm:$0xff]
    %v92 = vld [vmem:[#allocation7 + $0x78] sm:$0xff]
    %v93 = vld [vmem:[%s3] sm:$0x1]
    %v94 = vstv %s75
    %v95 = vmul.f32 %v94, %v93
    %v97 = vlaneseq
    %v98 = vshrl.u32 %v97, 7
    %v99 = vsub.s32 0, %v98
    %v100 = vrot.slane %v95, %v99
    %102 = vmatprep.subr.mxu0 0.0
    %103 = vmatpush1.msra.mxu0 %v77
    %104 = vmatprep.subr.mxu0 0.0
    %105 = vmatpush1.msra.mxu0 %v78
    %106 = vmatprep.subr.mxu0 0.0
    %107 = vmatpush1.msra.mxu0 %v79
    %108 = vmatprep.subr.mxu0 0.0
    %109 = vmatpush1.msra.mxu0 %v80
    %110 = vmatprep.subr.mxu0 0.0
    %111 = vmatpush1.msra.mxu0 %v81
    %112 = vmatprep.subr.mxu0 0.0
    %113 = vmatpush1.msra.mxu0 %v82
    %114 = vmatprep.subr.mxu0 0.0
    %115 = vmatpush1.msra.mxu0 %v83
    %116 = vmatprep.subr.mxu0 0.0
    %117 = vmatpush1.msra.mxu0 %v84
    %118 = vmatprep.subr.mxu0 0.0
    %119 = vmatpush1.msra.mxu0 %v85
    %120 = vmatprep.subr.mxu0 0.0
    %121 = vmatpush1.msra.mxu0 %v86
    %122 = vmatprep.subr.mxu0 0.0
    %123 = vmatpush1.msra.mxu0 %v87
    %124 = vmatprep.subr.mxu0 0.0
    %125 = vmatpush1.msra.mxu0 %v88
    %126 = vmatprep.subr.mxu0 0.0
    %127 = vmatpush1.msra.mxu0 %v89
    %128 = vmatprep.subr.mxu0 0.0
    %129 = vmatpush1.msra.mxu0 %v90
    %130 = vmatprep.subr.mxu0 0.0
    %131 = vmatpush1.msra.mxu0 %v91
    %132 = vmatprep.subr.mxu0 0.0
    %133 = vmatpush1.msra.mxu0 %v92
    %134 = vmatprep.subr.mxu0 0.0
    %135 = vmatpush1.msra.mxu0 0.0
    %136 = vmatprep.subr.mxu0 0.0
    %137 = vmatpush1.msra.mxu0 0.0
    %138 = vmatprep.subr.mxu0 0.0
    %139 = vmatpush1.msra.mxu0 0.0
    %140 = vmatprep.subr.mxu0 0.0
    %141 = vmatpush1.msra.mxu0 0.0
    %142 = vmatprep.subr.mxu0 0.0
    %143 = vmatpush1.msra.mxu0 0.0
    %144 = vmatprep.subr.mxu0 0.0
    %145 = vmatpush1.msra.mxu0 0.0
    %146 = vmatprep.subr.mxu0 0.0
    %147 = vmatpush1.msra.mxu0 0.0
    %148 = vmatprep.subr.mxu0 0.0
    %149 = vmatpush1.msra.mxu0 0.0
    %150 = vmatprep.subr.mxu0 0.0
    %151 = vmatpush1.msra.mxu0 0.0
    %152 = vmatprep.subr.mxu0 0.0
    %153 = vmatpush1.msra.mxu0 0.0
    %154 = vmatprep.subr.mxu0 0.0
    %155 = vmatpush1.msra.mxu0 0.0
    %156 = vmatprep.subr.mxu0 0.0
    %157 = vmatpush1.msra.mxu0 0.0
    %158 = vmatprep.subr.mxu0 0.0
    %159 = vmatpush1.msra.mxu0 0.0
    %160 = vmatprep.subr.mxu0 0.0
    %161 = vmatpush1.msra.mxu0 0.0
    %162 = vmatprep.subr.mxu0 0.0
    %163 = vmatpush1.msra.mxu0 0.0
    %164 = vmatprep.subr.mxu0 0.0
    %165 = vmatpush1.msra.mxu0 0.0
    %166 = vmatprep.mubr.f32.mxu0 0.0
    %167 = vmatmul.mubr.f32.gmra.mrb[0].mxu0 %v76
    %v168 = vpop.f32.mrb[0].mxu0
    %v169 = vadd.f32 %v100, %v168
    %v170 = vpop.f32.mrb[0].mxu0
    %171 = vdwg.mxu0
    %v172 = vld [vmem:[%s4] sm:$0x1]
    %v174 = vlaneseq
    %v175 = vshrl.u32 %v174, 7
    %v176 = vsub.s32 0, %v175
    %v177 = vrot.slane %v172, %v176
    %v179 = vadd.f32 %v169, %v177
    %v180 = vtanh.pop %v179
    %v181 = vld [vmem:[#allocation9] sm:$0xff]
    %v182 = vld [vmem:[#allocation9 + $0x8] sm:$0xff]
    %v183 = vld [vmem:[#allocation9 + $0x10] sm:$0xff]
    %v184 = vld [vmem:[#allocation9 + $0x18] sm:$0xff]
    %v185 = vld [vmem:[#allocation9 + $0x20] sm:$0xff]
    %v186 = vld [vmem:[#allocation9 + $0x28] sm:$0xff]
    %v187 = vld [vmem:[#allocation9 + $0x30] sm:$0xff]
    %v188 = vld [vmem:[#allocation9 + $0x38] sm:$0xff]
    %v189 = vld [vmem:[#allocation9 + $0x40] sm:$0xff]
    %v190 = vld [vmem:[#allocation9 + $0x48] sm:$0xff]
    %v191 = vld [vmem:[#allocation9 + $0x50] sm:$0xff]
    %v192 = vld [vmem:[#allocation9 + $0x58] sm:$0xff]
    %v193 = vld [vmem:[#allocation9 + $0x60] sm:$0xff]
    %v194 = vld [vmem:[#allocation9 + $0x68] sm:$0xff]
    %v195 = vld [vmem:[#allocation9 + $0x70] sm:$0xff]
    %v196 = vld [vmem:[#allocation9 + $0x78] sm:$0xff]
    %v197 = vld [vmem:[%s6] sm:$0x1]
    %v199 = vlaneseq
    %v200 = vshrl.u32 %v199, 7
    %v201 = vsub.s32 0, %v200
    %v202 = vrot.slane %v197, %v201
    %204 = vmatprep.subr.mxu0 0.0
    %205 = vmatpush1.msra.mxu0 %v181
    %206 = vmatprep.subr.mxu0 0.0
    %207 = vmatpush1.msra.mxu0 %v182
    %208 = vmatprep.subr.mxu0 0.0
    %209 = vmatpush1.msra.mxu0 %v183
    %210 = vmatprep.subr.mxu0 0.0
    %211 = vmatpush1.msra.mxu0 %v184
    %212 = vmatprep.subr.mxu0 0.0
    %213 = vmatpush1.msra.mxu0 %v185
    %214 = vmatprep.subr.mxu0 0.0
    %215 = vmatpush1.msra.mxu0 %v186
    %216 = vmatprep.subr.mxu0 0.0
    %217 = vmatpush1.msra.mxu0 %v187
    %218 = vmatprep.subr.mxu0 0.0
    %219 = vmatpush1.msra.mxu0 %v188
    %220 = vmatprep.subr.mxu0 0.0
    %221 = vmatpush1.msra.mxu0 %v189
    %222 = vmatprep.subr.mxu0 0.0
    %223 = vmatpush1.msra.mxu0 %v190
    %224 = vmatprep.subr.mxu0 0.0
    %225 = vmatpush1.msra.mxu0 %v191
    %226 = vmatprep.subr.mxu0 0.0
    %227 = vmatpush1.msra.mxu0 %v192
    %228 = vmatprep.subr.mxu0 0.0
    %229 = vmatpush1.msra.mxu0 %v193
    %230 = vmatprep.subr.mxu0 0.0
    %231 = vmatpush1.msra.mxu0 %v194
    %232 = vmatprep.subr.mxu0 0.0
    %233 = vmatpush1.msra.mxu0 %v195
    %234 = vmatprep.subr.mxu0 0.0
    %235 = vmatpush1.msra.mxu0 %v196
    %236 = vmatprep.subr.mxu0 0.0
    %237 = vmatpush1.msra.mxu0 0.0
    %238 = vmatprep.subr.mxu0 0.0
    %239 = vmatpush1.msra.mxu0 0.0
    %240 = vmatprep.subr.mxu0 0.0
    %241 = vmatpush1.msra.mxu0 0.0
    %242 = vmatprep.subr.mxu0 0.0
    %243 = vmatpush1.msra.mxu0 0.0
    %244 = vmatprep.subr.mxu0 0.0
    %245 = vmatpush1.msra.mxu0 0.0
    %246 = vmatprep.subr.mxu0 0.0
    %247 = vmatpush1.msra.mxu0 0.0
    %248 = vmatprep.subr.mxu0 0.0
    %249 = vmatpush1.msra.mxu0 0.0
    %250 = vmatprep.subr.mxu0 0.0
    %251 = vmatpush1.msra.mxu0 0.0
    %252 = vmatprep.subr.mxu0 0.0
    %253 = vmatpush1.msra.mxu0 0.0
    %254 = vmatprep.subr.mxu0 0.0
    %255 = vmatpush1.msra.mxu0 0.0
    %256 = vmatprep.subr.mxu0 0.0
    %257 = vmatpush1.msra.mxu0 0.0
    %258 = vmatprep.subr.mxu0 0.0
    %259 = vmatpush1.msra.mxu0 0.0
    %260 = vmatprep.subr.mxu0 0.0
    %261 = vmatpush1.msra.mxu0 0.0
    %262 = vmatprep.subr.mxu0 0.0
    %263 = vmatpush1.msra.mxu0 0.0
    %264 = vmatprep.subr.mxu0 0.0
    %265 = vmatpush1.msra.mxu0 0.0
    %266 = vmatprep.subr.mxu0 0.0
    %267 = vmatpush1.msra.mxu0 0.0
    %268 = vmatprep.mubr.f32.mxu0 0.0
    %269 = vmatmul.mubr.f32.gmra.mrb[0].mxu0 %v180
    %v270 = vpop.f32.mrb[0].mxu0
    %v271 = vadd.f32 %v202, %v270
    %v272 = vpop.f32.mrb[0].mxu0
    %273 = vdwg.mxu0
    %274 = vst [vmem:[#allocation10] sm:$0xff] %v271
    %v275 = vmul.f32 %v180, %v180
    %v276 = vsub.f32 1.0, %v275
    %v277 = vld [vmem:[%s7] sm:$0x1]
    %v279 = vlaneseq
    %v280 = vshrl.u32 %v279, 7
    %v281 = vsub.s32 0, %v280
    %v282 = vrot.slane %v277, %v281
    %v284 = vmul.f32 %v276, %v282
    %285 = vadd.xlane.f32.xlu0 %v284
    %v286 = vpop.xlane.xlu0 %285
    %v287 = vsub.f32 0.0, %v286
    %288 = vst [vmem:[#allocation11] sm:$0xff] %v287
    %v289 = vand.u32 2147483647, %v271
    %290 = vadd.xlane.f32.xlu0 %v289
    %v291 = vpop.xlane.xlu0 %290
    %v292 = vrot.slane %v291, 4
    %v293 = vadd.f32 %v291, %v292
    %v294 = vrot.slane %v293, 2
    %v295 = vadd.f32 %v293, %v294
    %v296 = vrot.slane %v295, 1
    %v297 = vadd.f32 %v295, %v296
    %s298 = vtos %v297
    %s299 = smul.f32 %s298, 0.0078125
    %s300 = scalar_lea.smem [#allocation13], 0
    %301 = sst [smem:[%s300]] %s299
    %v302 = vmul.f32 %v271, %v271
    %303 = vadd.xlane.f32.xlu0 %v302
    %v304 = vpop.xlane.xlu0 %303
    %v305 = vrot.slane %v304, 4
    %v306 = vadd.f32 %v304, %v305
    %v307 = vrot.slane %v306, 2
    %v308 = vadd.f32 %v306, %v307
    %v309 = vrot.slane %v308, 1
    %v310 = vadd.f32 %v308, %v309
    %s311 = vtos %v310
    %s312 = smul.f32 %s311, 0.0078125
    %s313 = scalar_lea.smem [#allocation13], 1
    %314 = sst [smem:[%s313]] %s312
    // Predicated region
    $region46: #{tpu_custom_call.1} parent=1 // pred_check
      _
    $region47: #{tpu_custom_call.1} parent=1 // pred_check_branch
      %316 = sbr.rel (0) target = $region49
    $region48: #{tpu_custom_call.1} parent=1 // pred_region
      %s318 = ssub.s32 128, 128
      %319 = vsyncadd [#allocation5], %s318
      %s321 = sshll.u32 [#allocation10], 4
      %s322 = int_to_ptr.vmem [resolvable:$true] %s321
      %324 = dma.vmem_to_hbm [thread:$0]  %s322, 128, %s8, [#allocation5]
    $region49: #{tpu_custom_call.1} parent=1 // pred_fallthru
      _
    // Predicated region
    $region50: #{tpu_custom_call.1} parent=1 // pred_check
      _
    $region51: #{tpu_custom_call.1} parent=1 // pred_check_branch
      %326 = sbr.rel (0) target = $region53
    $region52: #{tpu_custom_call.1} parent=1 // pred_region
      %s328 = ssub.s32 128, 128
      %329 = vsyncadd [#allocation12], %s328
      %s331 = sshll.u32 [#allocation11], 4
      %s332 = int_to_ptr.vmem [resolvable:$true] %s331
      %334 = dma.vmem_to_hbm [thread:$0]  %s332, 128, %s9, [#allocation12]
    $region53: #{tpu_custom_call.1} parent=1 // pred_fallthru
      _
    // Predicated region
    $region54: #{tpu_custom_call.1} parent=1 // pred_check
      _
    $region55: #{tpu_custom_call.1} parent=1 // pred_check_branch
      %336 = sbr.rel (0) target = $region57
    $region56: #{tpu_custom_call.1} parent=1 // pred_region
      %s338 = ssub.s32 16, 16
      %339 = vsyncadd [#allocation6], %s338
      %342 = dma.smem_to_hbm [#allocation13], 16, %s10, [#allocation6]
    $region57: #{tpu_custom_call.1} parent=1 // pred_fallthru
      _
    // Predicated region
    $region58: #{tpu_custom_call.1} parent=1 // pred_check
      _
    $region59: #{tpu_custom_call.1} parent=1 // pred_check_branch
      %344 = sbr.rel (0) target = $region61
    $region60: #{tpu_custom_call.1} parent=1 // pred_region
      %345 = dma.done [#allocation5], 128
    $region61: #{tpu_custom_call.1} parent=1 // pred_fallthru
      _
    // Predicated region
    $region62: #{tpu_custom_call.1} parent=1 // pred_check
      _
    $region63: #{tpu_custom_call.1} parent=1 // pred_check_branch
      %347 = sbr.rel (0) target = $region65
    $region64: #{tpu_custom_call.1} parent=1 // pred_region
      %348 = dma.done [#allocation12], 128
    $region65: #{tpu_custom_call.1} parent=1 // pred_fallthru
      _
    // Predicated region
    $region66: #{tpu_custom_call.1} parent=1 // pred_check
      _
    $region67: #{tpu_custom_call.1} parent=1 // pred_check_branch
      %350 = sbr.rel (0) target = $region69
    $region68: #{tpu_custom_call.1} parent=1 // pred_region
      %351 = dma.done [#allocation6], 16
    $region69: #{tpu_custom_call.1} parent=1 // pred_fallthru
      _
    %352 = sfence
    %353 = vsyncpa [#allocation4], 1
    %354 = vsyncpa [#allocation8], 1
    %355 = vsyncpa [#allocation5], 1
    %356 = vsyncpa [#allocation12], 1
    %357 = vsyncpa [#allocation6], 1

</llo_original>
